<compile_context>
chip_gen: v7x
topology: tpu7x:2x2x1
jax: 0.10.0
libtpu: 0.0.40
codegen_flags: <defaults>
</compile_context>

<pallas_src>
import functools

import jax
import jax.numpy as jnp
from jax.experimental import pallas as pl
from jax.experimental.pallas import tpu as pltpu


_HALF_LOG_2PI = 0.9189385332046727  # 0.5 * log(2*pi)


def _lgamma(x):
    """lgamma(x) for x >= ~1, elementwise.

    Shift-by-7 + Stirling series:
        lgamma(x) = lgamma(x + 7) - log(x (x+1) ... (x+6))
    with, for t = x + 7 >= 8:
        lgamma(t) ~ (t - 0.5) log t - t + 0.5 log(2 pi)
                    + 1/(12 t) - 1/(360 t^3) + 1/(1260 t^5)

    EUP cost: 1 exact divide + 2 logs per element (vs 8 divides + 2 logs for
    the per-term Lanczos sum); everything else is VPU mul/add.
    Accurate to ~1e-6 absolute in f32 for 1 <= x <~ 1e5 (x**7 must stay
    finite in f32), which covers count profiles / per-row totals here.
    """
    x = x.astype(jnp.float32)
    p = x * (x + 1.0) * (x + 2.0) * (x + 3.0) * (x + 4.0) * (x + 5.0) * (x + 6.0)
    t = x + 7.0
    w = 1.0 / t                      # exact divide (single EUP op)
    w2 = w * w
    corr = w * (1.0 / 12.0 - w2 * (1.0 / 360.0 - w2 * (1.0 / 1260.0)))
    return (t - 0.5) * jnp.log(t) - t + _HALF_LOG_2PI + corr - jnp.log(p)


def _mnll_partial_kernel(total_b, profile_pred_ref, profile_target_ref, out_ref):
    """One batch tile: sum over valid rows of the multinomial log-likelihood,
    written as a lane-dense (1, 8, 128) broadcast partial."""
    i = pl.program_id(0)

    logits = profile_pred_ref[...].astype(jnp.float32)                    # (TB, L)
    counts = jnp.maximum(profile_target_ref[...].astype(jnp.float32), 1e-8)

    tb = logits.shape[0]

    # log_softmax over the last (lane) dim, numerically stable, single pass.
    m = jnp.max(logits, axis=-1, keepdims=True)
    z = logits - m
    lse = jnp.log(jnp.sum(jnp.exp(z), axis=-1, keepdims=True))
    log_probs = z - lse                                                   # (TB, L)

    # Multinomial log-likelihood per row.
    ll = jnp.sum(counts * log_probs, axis=-1, keepdims=True)              # (TB, 1)
    total = jnp.sum(counts, axis=-1, keepdims=True)                       # (TB, 1)
    ll = ll + _lgamma(total + 1.0) - jnp.sum(_lgamma(counts + 1.0),
                                             axis=-1, keepdims=True)

    # Mask rows past the true batch size (partial last tile).
    rows = i * tb + jax.lax.broadcasted_iota(jnp.int32, (tb, 1), 0)
    ll = jnp.where(rows < total_b, ll, 0.0)

    partial = jnp.sum(ll)                                                 # scalar
    # Lane-dense (8, 128) unmasked store; wrapper reads [tile, 0, 0].
    out_ref[...] = jnp.full(out_ref.shape, partial, dtype=jnp.float32)


def _pick_tile_b(batch, length):
    """Largest batch tile keeping 2 inputs x 2 pipeline buffers well under the
    scoped-VMEM budget (conservative enough for v7x's 64 MiB physical VMEM)."""
    bytes_per_row = 2 * 2 * length * 4            # 2 inputs, double-buffered, f32
    cap = min(512, max(8, (8 * 1024 * 1024) // bytes_per_row))
    cap = max(8, (cap // 8) * 8)
    return batch if batch <= cap else cap


def multinomial_nll(logits, true_counts, *, tile_b=None):
    """Pallas MultinomialNLLLoss.forward: -mean_b(log multinomial likelihood)."""
    batch, length = logits.shape
    if tile_b is None:
        tile_b = _pick_tile_b(batch, length)
    num_tiles = pl.cdiv(batch, tile_b)

    kernel = functools.partial(_mnll_partial_kernel, batch)

    partials = pl.pallas_call(
        kernel,
        out_shape=jax.ShapeDtypeStruct((num_tiles, 8, 128), jnp.float32),
        grid=(num_tiles,),
        in_specs=[
            pl.BlockSpec((tile_b, length), lambda i: (i, 0)),   # profile_pred
            pl.BlockSpec((tile_b, length), lambda i: (i, 0)),   # profile_target
        ],
        out_specs=pl.BlockSpec((1, 8, 128), lambda i: (i, 0, 0)),
        compiler_params=pltpu.CompilerParams(
            dimension_semantics=("parallel",),   # shard grid over both v7x TCs
            vmem_limit_bytes=32 * 1024 * 1024,
        ),
    )(logits, true_counts)

    # Final reduction + mean over the *global* batch size in plain JAX.
    return -jnp.sum(partials[:, 0, 0]) / jnp.float32(batch)


def combined_loss(predictions, targets, avg_total_counts=None, alpha=1.0,
                  flavor=None, tile_b=None):
    """CombinedLoss.forward.

    predictions = [log_total_count_pred (B, 1), profile_pred (B, L)]
    targets     = [log_total_count_target (B, 1), profile_target (B, L)]
    """
    log_count_pred, profile_pred = predictions
    log_count_target, profile_target = targets

    if avg_total_counts is not None:
        lambda_weight = alpha * (avg_total_counts / 2.0)   # may be a traced value
    else:
        lambda_weight = 1.0

    if flavor == "mse":
        # Trivial elementwise path of the original module; plain JAX is ideal.
        profile_loss = jnp.mean(
            (profile_pred.astype(jnp.float32)
             - profile_target.astype(jnp.float32)) ** 2)
    else:
        profile_loss = multinomial_nll(profile_pred, profile_target,
                                       tile_b=tile_b)

    # O(B) count MSE + lambda combine stay in the wrapper (no lane-sparse
    # (B, 1) VMEM blocks, lambda_weight can be traced).
    diff = (log_count_pred.astype(jnp.float32)
            - log_count_target.astype(jnp.float32))
    count_loss = jnp.mean(diff * diff)

    return profile_loss + lambda_weight * count_loss


# ----------------------------------------------------------------------------
# Pure-JAX reference for sanity checking.
# ----------------------------------------------------------------------------
def _reference(predictions, targets, lambda_weight=1.0):
    log_count_pred, profile_pred = predictions
    log_count_target, profile_target = targets
    tc = jnp.clip(profile_target.astype(jnp.float32), 1e-8, None)
    lp = jax.nn.log_softmax(profile_pred.astype(jnp.float32), axis=-1)
    ll = jnp.sum(tc * lp, axis=-1)
    total = jnp.sum(tc, axis=-1)
    ll = ll + jax.scipy.special.gammaln(total + 1.0) - jnp.sum(
        jax.scipy.special.gammaln(tc + 1.0), axis=-1)
    mnll = -jnp.mean(ll)
    mse = jnp.mean((log_count_pred - log_count_target) ** 2)
    return mnll + lambda_weight * mse


if __name__ == "__main__":
    key = jax.random.PRNGKey(0)
    k1, k2, k3, k4 = jax.random.split(key, 4)

    # Small shapes; B is not a multiple of tile_b=8 so both the 2-step grid
    # and the partial-tile masking path are exercised.
    B, L = 12, 256
    profile_pred = jax.random.normal(k1, (B, L), dtype=jnp.float32)             # logits
    profile_target = jnp.exp(jax.random.normal(k2, (B, L), dtype=jnp.float32))  # counts >= 0
    log_count_pred = jax.random.normal(k3, (B, 1), dtype=jnp.float32)
    log_count_target = jax.random.normal(k4, (B, 1), dtype=jnp.float32)

    predictions = [log_count_pred, profile_pred]
    targets = [log_count_target, profile_target]

    loss = combined_loss(predictions, targets, tile_b=8)
    loss = jax.block_until_ready(loss)

    ref = _reference(predictions, targets)
    assert jnp.isfinite(loss), loss
    assert jnp.abs(loss - ref) < 1e-2 * (1.0 + jnp.abs(ref)), (loss, ref)

    print("KERNEL_OK")
</pallas_src>

<mosaic_0001>
module attributes {stable_mosaic.version = 11 : i64} {
  func.func @_mnll_partial_kernel(%arg0: i32, %arg1: memref<8x256xf32, #tpu.memory_space<vmem>>, %arg2: memref<8x256xf32, #tpu.memory_space<vmem>>, %arg3: memref<1x8x128xf32, #tpu.memory_space<vmem>>) attributes {dimension_semantics = [#tpu.dimension_semantics<parallel>], iteration_bounds = array<i64: 2>, scalar_prefetch = 0 : i64, scratch_operands = 0 : i64, tpu.core_type = #tpu.core_type<tc>, window_params = [{transform_indices = @transform_0, window_bounds = array<i64: 8, 256>}, {transform_indices = @transform_1, window_bounds = array<i64: 8, 256>}, {transform_indices = @transform_2, window_bounds = array<i64: 1, 8, 128>}]} {
    %c0 = arith.constant 0 : index
    %c0_0 = arith.constant 0 : index
    %0 = vector.load %arg1[%c0, %c0_0] : memref<8x256xf32, #tpu.memory_space<vmem>>, vector<8x256xf32>
    %c0_1 = arith.constant 0 : index
    %c0_2 = arith.constant 0 : index
    %1 = vector.load %arg2[%c0_1, %c0_2] : memref<8x256xf32, #tpu.memory_space<vmem>>, vector<8x256xf32>
    %cst = arith.constant 9.99999993E-9 : f32
    %2 = vector.broadcast %cst : f32 to vector<8x256xf32>
    %3 = arith.maximumf %1, %2 : vector<8x256xf32>
    %cst_3 = arith.constant dense<0xFF800000> : vector<8xf32>
    %4 = vector.multi_reduction <maximumf>, %0, %cst_3 [1] : vector<8x256xf32> to vector<8xf32>
    %5 = vector.shape_cast %4 : vector<8xf32> to vector<8x1xf32>
    %6 = vector.broadcast %5 : vector<8x1xf32> to vector<8x256xf32>
    %7 = arith.subf %0, %6 : vector<8x256xf32>
    %8 = math.exp %7 : vector<8x256xf32>
    %cst_4 = arith.constant dense<0.000000e+00> : vector<8xf32>
    %9 = vector.multi_reduction <add>, %8, %cst_4 [1] : vector<8x256xf32> to vector<8xf32>
    %10 = vector.shape_cast %9 : vector<8xf32> to vector<8x1xf32>
    %11 = math.log %10 : vector<8x1xf32>
    %12 = vector.broadcast %11 : vector<8x1xf32> to vector<8x256xf32>
    %13 = arith.subf %7, %12 : vector<8x256xf32>
    %14 = arith.mulf %3, %13 : vector<8x256xf32>
    %cst_5 = arith.constant dense<0.000000e+00> : vector<8xf32>
    %15 = vector.multi_reduction <add>, %14, %cst_5 [1] : vector<8x256xf32> to vector<8xf32>
    %16 = vector.shape_cast %15 : vector<8xf32> to vector<8x1xf32>
    %cst_6 = arith.constant dense<0.000000e+00> : vector<8xf32>
    %17 = vector.multi_reduction <add>, %3, %cst_6 [1] : vector<8x256xf32> to vector<8xf32>
    %18 = vector.shape_cast %17 : vector<8xf32> to vector<8x1xf32>
    %cst_7 = arith.constant 1.000000e+00 : f32
    %19 = vector.broadcast %cst_7 : f32 to vector<8x1xf32>
    %20 = arith.addf %18, %19 : vector<8x1xf32>
    %cst_8 = arith.constant 1.000000e+00 : f32
    %21 = vector.broadcast %cst_8 : f32 to vector<8x1xf32>
    %22 = arith.addf %20, %21 : vector<8x1xf32>
    %23 = arith.mulf %20, %22 : vector<8x1xf32>
    %cst_9 = arith.constant 2.000000e+00 : f32
    %24 = vector.broadcast %cst_9 : f32 to vector<8x1xf32>
    %25 = arith.addf %20, %24 : vector<8x1xf32>
    %26 = arith.mulf %23, %25 : vector<8x1xf32>
    %cst_10 = arith.constant 3.000000e+00 : f32
    %27 = vector.broadcast %cst_10 : f32 to vector<8x1xf32>
    %28 = arith.addf %20, %27 : vector<8x1xf32>
    %29 = arith.mulf %26, %28 : vector<8x1xf32>
    %cst_11 = arith.constant 4.000000e+00 : f32
    %30 = vector.broadcast %cst_11 : f32 to vector<8x1xf32>
    %31 = arith.addf %20, %30 : vector<8x1xf32>
    %32 = arith.mulf %29, %31 : vector<8x1xf32>
    %cst_12 = arith.constant 5.000000e+00 : f32
    %33 = vector.broadcast %cst_12 : f32 to vector<8x1xf32>
    %34 = arith.addf %20, %33 : vector<8x1xf32>
    %35 = arith.mulf %32, %34 : vector<8x1xf32>
    %cst_13 = arith.constant 6.000000e+00 : f32
    %36 = vector.broadcast %cst_13 : f32 to vector<8x1xf32>
    %37 = arith.addf %20, %36 : vector<8x1xf32>
    %38 = arith.mulf %35, %37 : vector<8x1xf32>
    %cst_14 = arith.constant 7.000000e+00 : f32
    %39 = vector.broadcast %cst_14 : f32 to vector<8x1xf32>
    %40 = arith.addf %20, %39 : vector<8x1xf32>
    %cst_15 = arith.constant 1.000000e+00 : f32
    %41 = vector.broadcast %cst_15 : f32 to vector<8x1xf32>
    %42 = arith.divf %41, %40 : vector<8x1xf32>
    %43 = arith.mulf %42, %42 : vector<8x1xf32>
    %cst_16 = arith.constant 7.93650805E-4 : f32
    %44 = vector.broadcast %cst_16 : f32 to vector<8x1xf32>
    %45 = arith.mulf %43, %44 : vector<8x1xf32>
    %cst_17 = arith.constant 0.00277777785 : f32
    %46 = vector.broadcast %cst_17 : f32 to vector<8x1xf32>
    %47 = arith.subf %46, %45 : vector<8x1xf32>
    %48 = arith.mulf %43, %47 : vector<8x1xf32>
    %cst_18 = arith.constant 0.0833333358 : f32
    %49 = vector.broadcast %cst_18 : f32 to vector<8x1xf32>
    %50 = arith.subf %49, %48 : vector<8x1xf32>
    %51 = arith.mulf %42, %50 : vector<8x1xf32>
    %cst_19 = arith.constant 5.000000e-01 : f32
    %52 = vector.broadcast %cst_19 : f32 to vector<8x1xf32>
    %53 = arith.subf %40, %52 : vector<8x1xf32>
    %54 = math.log %40 : vector<8x1xf32>
    %55 = arith.mulf %53, %54 : vector<8x1xf32>
    %56 = arith.subf %55, %40 : vector<8x1xf32>
    %cst_20 = arith.constant 0.918938517 : f32
    %57 = vector.broadcast %cst_20 : f32 to vector<8x1xf32>
    %58 = arith.addf %56, %57 : vector<8x1xf32>
    %59 = arith.addf %58, %51 : vector<8x1xf32>
    %60 = math.log %38 : vector<8x1xf32>
    %61 = arith.subf %59, %60 : vector<8x1xf32>
    %62 = arith.addf %16, %61 : vector<8x1xf32>
    %cst_21 = arith.constant 1.000000e+00 : f32
    %63 = vector.broadcast %cst_21 : f32 to vector<8x256xf32>
    %64 = arith.addf %3, %63 : vector<8x256xf32>
    %cst_22 = arith.constant 1.000000e+00 : f32
    %65 = vector.broadcast %cst_22 : f32 to vector<8x256xf32>
    %66 = arith.addf %64, %65 : vector<8x256xf32>
    %67 = arith.mulf %64, %66 : vector<8x256xf32>
    %cst_23 = arith.constant 2.000000e+00 : f32
    %68 = vector.broadcast %cst_23 : f32 to vector<8x256xf32>
    %69 = arith.addf %64, %68 : vector<8x256xf32>
    %70 = arith.mulf %67, %69 : vector<8x256xf32>
    %cst_24 = arith.constant 3.000000e+00 : f32
    %71 = vector.broadcast %cst_24 : f32 to vector<8x256xf32>
    %72 = arith.addf %64, %71 : vector<8x256xf32>
    %73 = arith.mulf %70, %72 : vector<8x256xf32>
    %cst_25 = arith.constant 4.000000e+00 : f32
    %74 = vector.broadcast %cst_25 : f32 to vector<8x256xf32>
    %75 = arith.addf %64, %74 : vector<8x256xf32>
    %76 = arith.mulf %73, %75 : vector<8x256xf32>
    %cst_26 = arith.constant 5.000000e+00 : f32
    %77 = vector.broadcast %cst_26 : f32 to vector<8x256xf32>
    %78 = arith.addf %64, %77 : vector<8x256xf32>
    %79 = arith.mulf %76, %78 : vector<8x256xf32>
    %cst_27 = arith.constant 6.000000e+00 : f32
    %80 = vector.broadcast %cst_27 : f32 to vector<8x256xf32>
    %81 = arith.addf %64, %80 : vector<8x256xf32>
    %82 = arith.mulf %79, %81 : vector<8x256xf32>
    %cst_28 = arith.constant 7.000000e+00 : f32
    %83 = vector.broadcast %cst_28 : f32 to vector<8x256xf32>
    %84 = arith.addf %64, %83 : vector<8x256xf32>
    %cst_29 = arith.constant 1.000000e+00 : f32
    %85 = vector.broadcast %cst_29 : f32 to vector<8x256xf32>
    %86 = arith.divf %85, %84 : vector<8x256xf32>
    %87 = arith.mulf %86, %86 : vector<8x256xf32>
    %cst_30 = arith.constant 7.93650805E-4 : f32
    %88 = vector.broadcast %cst_30 : f32 to vector<8x256xf32>
    %89 = arith.mulf %87, %88 : vector<8x256xf32>
    %cst_31 = arith.constant 0.00277777785 : f32
    %90 = vector.broadcast %cst_31 : f32 to vector<8x256xf32>
    %91 = arith.subf %90, %89 : vector<8x256xf32>
    %92 = arith.mulf %87, %91 : vector<8x256xf32>
    %cst_32 = arith.constant 0.0833333358 : f32
    %93 = vector.broadcast %cst_32 : f32 to vector<8x256xf32>
    %94 = arith.subf %93, %92 : vector<8x256xf32>
    %95 = arith.mulf %86, %94 : vector<8x256xf32>
    %cst_33 = arith.constant 5.000000e-01 : f32
    %96 = vector.broadcast %cst_33 : f32 to vector<8x256xf32>
    %97 = arith.subf %84, %96 : vector<8x256xf32>
    %98 = math.log %84 : vector<8x256xf32>
    %99 = arith.mulf %97, %98 : vector<8x256xf32>
    %100 = arith.subf %99, %84 : vector<8x256xf32>
    %cst_34 = arith.constant 0.918938517 : f32
    %101 = vector.broadcast %cst_34 : f32 to vector<8x256xf32>
    %102 = arith.addf %100, %101 : vector<8x256xf32>
    %103 = arith.addf %102, %95 : vector<8x256xf32>
    %104 = math.log %82 : vector<8x256xf32>
    %105 = arith.subf %103, %104 : vector<8x256xf32>
    %cst_35 = arith.constant dense<0.000000e+00> : vector<8xf32>
    %106 = vector.multi_reduction <add>, %105, %cst_35 [1] : vector<8x256xf32> to vector<8xf32>
    %107 = vector.shape_cast %106 : vector<8xf32> to vector<8x1xf32>
    %108 = arith.subf %62, %107 : vector<8x1xf32>
    %c8_i32 = arith.constant 8 : i32
    %109 = arith.muli %arg0, %c8_i32 : i32
    %110 = tpu.iota {dimensions = array<i32: 0>} : vector<8x1xi32>
    %111 = vector.broadcast %109 : i32 to vector<8x1xi32>
    %112 = arith.addi %111, %110 : vector<8x1xi32>
    %c12_i32 = arith.constant 12 : i32
    %113 = vector.broadcast %c12_i32 : i32 to vector<8x1xi32>
    %114 = arith.cmpi slt, %112, %113 : vector<8x1xi32>
    %cst_36 = arith.constant 0.000000e+00 : f32
    %115 = vector.broadcast %cst_36 : f32 to vector<8x1xf32>
    %116 = arith.select %114, %108, %115 : vector<8x1xi1>, vector<8x1xf32>
    %117 = vector.shape_cast %116 : vector<8x1xf32> to vector<1x8x1xf32>
    %cst_37 = arith.constant dense<0.000000e+00> : vector<1xf32>
    %118 = vector.multi_reduction <add>, %117, %cst_37 [1, 2] : vector<1x8x1xf32> to vector<1xf32>
    %119 = vector.shape_cast %118 : vector<1xf32> to vector<1x1x1xf32>
    %120 = vector.extract %119[0, 0, 0] : f32 from vector<1x1x1xf32>
    %121 = vector.broadcast %120 : f32 to vector<1x8x128xf32>
    %c0_38 = arith.constant 0 : index
    %c0_39 = arith.constant 0 : index
    %c0_40 = arith.constant 0 : index
    %122 = vector.load %arg3[%c0_38, %c0_39, %c0_40] : memref<1x8x128xf32, #tpu.memory_space<vmem>>, vector<1x8x128xf32>
    tpu.vector_store %arg3[%c0_38, %c0_39, %c0_40], %121 {strides = array<i32>} : memref<1x8x128xf32, #tpu.memory_space<vmem>>, vector<1x8x128xf32>,
    return
  }
  func.func @transform_0(%arg0: i32) -> (i32, i32) {
    %c0_i32 = arith.constant 0 : i32
    %c0_i32_0 = arith.constant 0 : i32
    return %arg0, %c0_i32 : i32, i32
  }
  func.func @transform_1(%arg0: i32) -> (i32, i32) {
    %c0_i32 = arith.constant 0 : i32
    %c0_i32_0 = arith.constant 0 : i32
    return %arg0, %c0_i32 : i32, i32
  }
  func.func @transform_2(%arg0: i32) -> (i32, i32, i32) {
    %c0_i32 = arith.constant 0 : i32
    %c0_i32_0 = arith.constant 0 : i32
    %c0_i32_1 = arith.constant 0 : i32
    return %arg0, %c0_i32, %c0_i32_0 : i32, i32, i32
  }
}

</mosaic_0001>

<llo_original>
// kernel: tpu_custom_call.1
$region0: #{tpu_custom_call.1}
  #allocation0 [shape = 'u32[]', space=smem, size = 0x4, offset = 0x4, fixed_abs, tag = 'smem constant byte address 0x4 - core index']
  #allocation1 [shape = 'u32[144,128]{1,0:T(1,128)}', space=vmem, size = 0x12000, scoped, tag = 'internal scratch']
  %s0 = inlined_call_operand.hbm [shape: f32[12,256], index: 0, kind: input, shape index: {}]
  %s1 = inlined_call_operand.hbm [shape: f32[12,256], index: 1, kind: input, shape index: {}]
  %s2 = inlined_call_operand.hbm [shape: f32[2,8,128], index: 2, kind: output, shape index: {}]
  %s3 = sld [smem:[#allocation0]]
  $region49: #{tpu_custom_call.1} parent=0
    _
  %s5 = ssub.s32 1, %s3
  %s6 = scalar_select 0, %s5, %s3
  $region1: #{tpu_custom_call.1} parent=0
    #allocation2 [shape = 'u8[16384]{0}', space=vmem, size = 0x4000, scoped, tag = 'input window, operand 0']
    #allocation3 [shape = 's32[2]{0}', space=sflag, size = 0x8, scoped, tag = 'scoped memory for tpu_custom_call.1']
    #allocation4 [shape = 's32[2]{0}', space=sflag, size = 0x8, scoped, tag = 'scoped memory for tpu_custom_call.1']
    #allocation5 [shape = 'u8[16384]{0}', space=vmem, size = 0x4000, scoped, tag = 'input window, operand 1']
    #allocation6 [shape = 's32[2]{0}', space=sflag, size = 0x8, scoped, tag = 'scoped memory for tpu_custom_call.1']
    #allocation7 [shape = 'u8[8192]{0}', space=vmem, size = 0x2000, scoped, tag = 'output window, operand 0']
    %7 = vsyncpa [#allocation3], 0
    %s8 = scalar_lea.sflag [#allocation3], 1
    %9 = vsyncpa %s8, 0
    %10 = vsyncpa [#allocation6], 0
    %s11 = scalar_lea.sflag [#allocation6], 1
    %12 = vsyncpa %s11, 0
    %13 = vsyncpa [#allocation4], 0
    %s14 = scalar_lea.sflag [#allocation4], 1
    %15 = vsyncpa %s14, 0
    loop: start=0, step=1, limit=4
    $region2: #{tpu_custom_call.1} parent=1 // loop_pre_header
      _
    $region3: #{tpu_custom_call.1} parent=1 // loop_header
      %s17 = sphi 0, %s21
      %p18 = scmp.ge.s32.totalorder %s17, 4
      %s27 = sphi 0, %s29
      %s30 = sphi 0, %s27
      %s31 = sphi 0, %s30
      %s47 = sphi 0, %s31
      %s53 = sphi 0, %s55
      %s56 = sphi 0, %s53
      %s57 = sphi 0, %s56
      %s73 = sphi 0, %s57
      %s79 = sphi 0, %s81
      %s82 = sphi 0, %s79
      %s83 = sphi 0, %s82
      %s99 = sphi 0, %s83
    $region4: #{tpu_custom_call.1} parent=1 // loop_header_branch
      %20 = sbr.rel (%p18) target = $region8
    $region5: #{tpu_custom_call.1} parent=1 // loop_body
      %s22 = ssub.s32 %s17, 1
      %s23 = ssub.s32 %s17, 2
      %s24 = sadd.s32 %s17, 1
      %s25 = ssub.s32 %s17, %s24
      %p26 = scmp.eq.s32.totalorder %s25, 0
      %s28 = sadd.s32 %s27, 1
      %s29 = scalar_select %p26, %s27, %s28
      %p32 = pneg %p26
      %p33 = scmp.eq.s32.totalorder %s17, 1
      %p34 = por %p32, %p33
      %p35 = scmp.ne.s32.totalorder %s27, %s30
      %p36 = scmp.eq.s32.totalorder %s17, 0
      %p37 = por %p35, %p36
      %p38 = scmp.ne.s32.totalorder %s27, %s30
      %p39 = scmp.eq.s32.totalorder %s22, 1
      %p40 = por %p38, %p39
      %p41 = scmp.ne.s32.totalorder %s30, %s31
      %p42 = scmp.eq.s32.totalorder %s22, 0
      %p43 = por %p41, %p42
      %p44 = scmp.ne.s32.totalorder %s30, %s31
      %p45 = scmp.eq.s32.totalorder %s23, 1
      %p46 = por %p44, %p45
      %p48 = scmp.ne.s32.totalorder %s31, %s47
      %p49 = scmp.eq.s32.totalorder %s23, 0
      %p50 = por %p48, %p49
      %s51 = ssub.s32 %s17, %s24
      %p52 = scmp.eq.s32.totalorder %s51, 0
      %s54 = sadd.s32 %s53, 1
      %s55 = scalar_select %p52, %s53, %s54
      %p58 = pneg %p52
      %p59 = scmp.eq.s32.totalorder %s17, 1
      %p60 = por %p58, %p59
      %p61 = scmp.ne.s32.totalorder %s53, %s56
      %p62 = scmp.eq.s32.totalorder %s17, 0
      %p63 = por %p61, %p62
      %p64 = scmp.ne.s32.totalorder %s53, %s56
      %p65 = scmp.eq.s32.totalorder %s22, 1
      %p66 = por %p64, %p65
      %p67 = scmp.ne.s32.totalorder %s56, %s57
      %p68 = scmp.eq.s32.totalorder %s22, 0
      %p69 = por %p67, %p68
      %p70 = scmp.ne.s32.totalorder %s56, %s57
      %p71 = scmp.eq.s32.totalorder %s23, 1
      %p72 = por %p70, %p71
      %p74 = scmp.ne.s32.totalorder %s57, %s73
      %p75 = scmp.eq.s32.totalorder %s23, 0
      %p76 = por %p74, %p75
      %s77 = ssub.s32 %s17, %s24
      %p78 = scmp.eq.s32.totalorder %s77, 0
      %s80 = sadd.s32 %s79, 1
      %s81 = scalar_select %p78, %s79, %s80
      %p84 = pneg %p78
      %p85 = scmp.eq.s32.totalorder %s17, 1
      %p86 = por %p84, %p85
      %p87 = scmp.ne.s32.totalorder %s79, %s82
      %p88 = scmp.eq.s32.totalorder %s17, 0
      %p89 = por %p87, %p88
      %p90 = scmp.ne.s32.totalorder %s79, %s82
      %p91 = scmp.eq.s32.totalorder %s22, 1
      %p92 = por %p90, %p91
      %p93 = scmp.ne.s32.totalorder %s82, %s83
      %p94 = scmp.eq.s32.totalorder %s22, 0
      %p95 = por %p93, %p94
      %p96 = scmp.ne.s32.totalorder %s82, %s83
      %p97 = scmp.eq.s32.totalorder %s23, 1
      %p98 = por %p96, %p97
      %p100 = scmp.ne.s32.totalorder %s83, %s99
      %p101 = scmp.eq.s32.totalorder %s23, 0
      %p102 = por %p100, %p101
      %p103 = scmp.le.s32.totalorder 1, %s17
      %p104 = scmp.lt.s32.totalorder %s17, 3
      %p105 = pnand %p103, %p104
      %p106 = pneg %p105
      // Predicated region
      $region9: #{tpu_custom_call.1} parent=5 // pred_check
        _
      $region10: #{tpu_custom_call.1} parent=5 // pred_check_branch
        %108 = sbr.rel (%p105) target = $region12
      $region11: #{tpu_custom_call.1} parent=5 // pred_region
        %s109 = ssub.s32 %s17, 1
      $region12: #{tpu_custom_call.1} parent=5 // pred_fallthru
        _
      %p110 = scmp.lt.s32.totalorder %s17, 2
      // Predicated region
      $region13: #{tpu_custom_call.1} parent=5 // pred_check
        %p111 = pneg %p110
      $region14: #{tpu_custom_call.1} parent=5 // pred_check_branch
        %113 = sbr.rel (%p111) target = $region16
      $region15: #{tpu_custom_call.1} parent=5 // pred_region
        // Predicated region
        $region17: #{tpu_custom_call.1} parent=15 // pred_check
          %p114 = pneg %p37
        $region18: #{tpu_custom_call.1} parent=15 // pred_check_branch
          %116 = sbr.rel (%p114) target = $region20
        $region19: #{tpu_custom_call.1} parent=15 // pred_region
          %s117 = sand.u32 %s27, 1
          %s118 = scalar_lea.sflag [#allocation3], %s117
          %s119 = sand.u32 %s27, 1
          %s120 = smul.addr %s119, 16
          %s121 = scalar_lea.vmem [#allocation2], %s120
          %s123 = ssub.s32 256, 256
          %124 = vsyncadd %s118, %s123
          %s125 = smul.addr %s17, 2
          %s126 = smul.addr %s125, 128
          %s127 = scalar_lea.hbm %s0, %s126
          %s129 = sshll.u32 %s121, 4
          %s130 = int_to_ptr.vmem [resolvable:$true] %s129
          %132 = dma.hbm_to_vmem [thread:$0]  %s127, 256, %s130, %s118
        $region20: #{tpu_custom_call.1} parent=15 // pred_fallthru
          _
        // Predicated region
        $region21: #{tpu_custom_call.1} parent=15 // pred_check
          %p133 = pneg %p63
        $region22: #{tpu_custom_call.1} parent=15 // pred_check_branch
          %135 = sbr.rel (%p133) target = $region24
        $region23: #{tpu_custom_call.1} parent=15 // pred_region
          %s136 = sand.u32 %s53, 1
          %s137 = scalar_lea.sflag [#allocation6], %s136
          %s138 = sand.u32 %s53, 1
          %s139 = smul.addr %s138, 16
          %s140 = scalar_lea.vmem [#allocation5], %s139
          %s142 = ssub.s32 256, 256
          %143 = vsyncadd %s137, %s142
          %s144 = smul.addr %s17, 2
          %s145 = smul.addr %s144, 128
          %s146 = scalar_lea.hbm %s1, %s145
          %s148 = sshll.u32 %s140, 4
          %s149 = int_to_ptr.vmem [resolvable:$true] %s148
          %151 = dma.hbm_to_vmem [thread:$0]  %s146, 256, %s149, %s137
        $region24: #{tpu_custom_call.1} parent=15 // pred_fallthru
          _
      $region16: #{tpu_custom_call.1} parent=5 // pred_fallthru
        _
      %p152 = scmp.le.s32.totalorder 1, %s17
      %p153 = scmp.lt.s32.totalorder %s17, 3
      %p154 = pnand %p152, %p153
      %p155 = pneg %p154
      // Predicated region
      $region25: #{tpu_custom_call.1} parent=5 // pred_check
        _
      $region26: #{tpu_custom_call.1} parent=5 // pred_check_branch
        %157 = sbr.rel (%p154) target = $region28
      $region27: #{tpu_custom_call.1} parent=5 // pred_region
        %s158 = ssub.s32 %s17, 1
        %s159 = sand.u32 %s30, 1
        %s160 = scalar_lea.sflag [#allocation3], %s159
        %s161 = sand.u32 %s30, 1
        %s162 = smul.addr %s161, 16
        %s163 = scalar_lea.vmem [#allocation2], %s162
        // Predicated region
        $region29: #{tpu_custom_call.1} parent=27 // pred_check
          %p164 = pneg %p43
        $region30: #{tpu_custom_call.1} parent=27 // pred_check_branch
          %166 = sbr.rel (%p164) target = $region32
        $region31: #{tpu_custom_call.1} parent=27 // pred_region
          %167 = dma.done %s160, 256
        $region32: #{tpu_custom_call.1} parent=27 // pred_fallthru
          _
        %s168 = sand.u32 %s56, 1
        %s169 = scalar_lea.sflag [#allocation6], %s168
        %s170 = sand.u32 %s56, 1
        %s171 = smul.addr %s170, 16
        %s172 = scalar_lea.vmem [#allocation5], %s171
        // Predicated region
        $region33: #{tpu_custom_call.1} parent=27 // pred_check
          %p173 = pneg %p69
        $region34: #{tpu_custom_call.1} parent=27 // pred_check_branch
          %175 = sbr.rel (%p173) target = $region36
        $region35: #{tpu_custom_call.1} parent=27 // pred_region
          %176 = dma.done %s169, 256
        $region36: #{tpu_custom_call.1} parent=27 // pred_fallthru
          _
        %s177 = sand.u32 %s30, 1
        %s178 = scalar_lea.sflag [#allocation3], %s177
        %s179 = sand.u32 %s30, 1
        %s180 = smul.addr %s179, 16
        %s181 = scalar_lea.vmem [#allocation2], %s180
        %p182 = pneg %p43
        %p183 = pneg %p40
        %s184 = sand.u32 %s56, 1
        %s185 = scalar_lea.sflag [#allocation6], %s184
        %s186 = sand.u32 %s56, 1
        %s187 = smul.addr %s186, 16
        %s188 = scalar_lea.vmem [#allocation5], %s187
        %p189 = pneg %p69
        %p190 = pneg %p66
        %p191 = pneg %p95
        %p192 = pneg %p92
        %s193 = sand.u32 %s82, 1
        %s194 = scalar_lea.sflag [#allocation4], %s193
        %s195 = sand.u32 %s82, 1
        %s196 = smul.addr %s195, 8
        %s197 = scalar_lea.vmem [#allocation7], %s196
        %v198 = vld [vmem:[%s163] sm:$0xff]
        %v199 = vld [vmem:[%s163 + $0x8] sm:$0xff]
        %v200 = vld [vmem:[%s172] sm:$0xff]
        %v201 = vld [vmem:[%s172 + $0x8] sm:$0xff]
        %v202 = vmax.f32 %v200, 1e-08
        %v203 = vmax.f32 %v201, 1e-08
        %v204 = vmax.f32 %v198, %v199
        %205 = vmax.xlane.f32.xlu0 %v204
        %v206 = vpop.xlane.xlu0 %205
        %v207 = vsub.f32 %v198, %v206
        %v208 = vsub.f32 %v199, %v206
        %v209 = vmul.f32 %v207, 1.442695
        %v210 = vpow.pop %v209
        %v211 = vmul.f32 %v208, 1.442695
        %v212 = vpow.pop %v211
        %v213 = vadd.f32 %v210, %v212
        %214 = vadd.xlane.f32.xlu0 %v213
        %v215 = vpop.xlane.xlu0 %214
        %v216 = vlog2.pop %v215
        %v217 = vmul.f32 %v216, 0.6931472
        %v218 = vsub.f32 %v207, %v217
        %v219 = vsub.f32 %v208, %v217
        %v220 = vmul.f32 %v202, %v218
        %v221 = vmul.f32 %v203, %v219
        %v222 = vadd.f32 %v220, %v221
        %223 = vadd.xlane.f32.xlu0 %v222
        %v224 = vpop.xlane.xlu0 %223
        %v225 = vadd.f32 %v202, %v203
        %226 = vadd.xlane.f32.xlu0 %v225
        %v227 = vpop.xlane.xlu0 %226
        %v228 = vadd.f32 %v227, 1.0
        %v229 = vadd.f32 %v228, 1.0
        %v230 = vmul.f32 %v228, %v229
        %v231 = vadd.f32 %v228, 2.0
        %v232 = vmul.f32 %v230, %v231
        %v233 = vadd.f32 %v228, 3.0
        %v234 = vmul.f32 %v232, %v233
        %v235 = vadd.f32 %v228, 4.0
        %v236 = vmul.f32 %v234, %v235
        %v237 = vadd.f32 %v228, 5.0
        %v238 = vmul.f32 %v236, %v237
        %v239 = vadd.f32 %v228, 6.0
        %v240 = vmul.f32 %v238, %v239
        %v241 = vadd.f32 %v228, 7.0
        %v242 = vrcp.pop %v241
        %v243 = vmul.f32 1.0, %v242
        %v244 = vmul.f32 %v243, %v243
        %v245 = vmul.f32 %v244, 0.0007936508
        %v246 = vsub.f32 0.0027777778, %v245
        %v247 = vmul.f32 %v244, %v246
        %v248 = vsub.f32 0.083333336, %v247
        %v249 = vmul.f32 %v243, %v248
        %v250 = vsub.f32 %v241, 0.5
        %v251 = vlog2.pop %v241
        %v252 = vmul.f32 %v251, 0.6931472
        %v253 = vmul.f32 %v250, %v252
        %v254 = vsub.f32 %v253, %v241
        %v255 = vadd.f32 %v254, 0.9189385
        %v256 = vadd.f32 %v255, %v249
        %v257 = vlog2.pop %v240
        %v258 = vmul.f32 %v257, 0.6931472
        %v259 = vsub.f32 %v256, %v258
        %v260 = vadd.f32 %v224, %v259
        %v261 = vadd.f32 %v202, 1.0
        %v262 = vadd.f32 %v203, 1.0
        %v263 = vadd.f32 %v261, 1.0
        %v264 = vadd.f32 %v262, 1.0
        %v265 = vmul.f32 %v261, %v263
        %v266 = vmul.f32 %v262, %v264
        %v267 = vadd.f32 %v261, 2.0
        %v268 = vadd.f32 %v262, 2.0
        %v269 = vmul.f32 %v265, %v267
        %v270 = vmul.f32 %v266, %v268
        %v271 = vadd.f32 %v261, 3.0
        %v272 = vadd.f32 %v262, 3.0
        %v273 = vmul.f32 %v269, %v271
        %v274 = vmul.f32 %v270, %v272
        %v275 = vadd.f32 %v261, 4.0
        %v276 = vadd.f32 %v262, 4.0
        %v277 = vmul.f32 %v273, %v275
        %v278 = vmul.f32 %v274, %v276
        %v279 = vadd.f32 %v261, 5.0
        %v280 = vadd.f32 %v262, 5.0
        %v281 = vmul.f32 %v277, %v279
        %v282 = vmul.f32 %v278, %v280
        %v283 = vadd.f32 %v261, 6.0
        %v284 = vadd.f32 %v262, 6.0
        %v285 = vmul.f32 %v281, %v283
        %v286 = vmul.f32 %v282, %v284
        %v287 = vadd.f32 %v261, 7.0
        %v288 = vadd.f32 %v262, 7.0
        %v289 = vrcp.pop %v287
        %v290 = vmul.f32 1.0, %v289
        %v291 = vrcp.pop %v288
        %v292 = vmul.f32 1.0, %v291
        %v293 = vmul.f32 %v290, %v290
        %v294 = vmul.f32 %v292, %v292
        %v295 = vmul.f32 %v293, 0.0007936508
        %v296 = vmul.f32 %v294, 0.0007936508
        %v297 = vsub.f32 0.0027777778, %v295
        %v298 = vsub.f32 0.0027777778, %v296
        %v299 = vmul.f32 %v293, %v297
        %v300 = vmul.f32 %v294, %v298
        %v301 = vsub.f32 0.083333336, %v299
        %v302 = vsub.f32 0.083333336, %v300
        %v303 = vmul.f32 %v290, %v301
        %v304 = vmul.f32 %v292, %v302
        %v305 = vsub.f32 %v287, 0.5
        %v306 = vsub.f32 %v288, 0.5
        %v307 = vlog2.pop %v287
        %v308 = vmul.f32 %v307, 0.6931472
        %v309 = vlog2.pop %v288
        %v310 = vmul.f32 %v309, 0.6931472
        %v311 = vmul.f32 %v305, %v308
        %v312 = vmul.f32 %v306, %v310
        %v313 = vsub.f32 %v311, %v287
        %v314 = vsub.f32 %v312, %v288
        %v315 = vadd.f32 %v313, 0.9189385
        %v316 = vadd.f32 %v314, 0.9189385
        %v317 = vadd.f32 %v315, %v303
        %v318 = vadd.f32 %v316, %v304
        %v319 = vlog2.pop %v285
        %v320 = vmul.f32 %v319, 0.6931472
        %v321 = vlog2.pop %v286
        %v322 = vmul.f32 %v321, 0.6931472
        %v323 = vsub.f32 %v317, %v320
        %v324 = vsub.f32 %v318, %v322
        %v325 = vadd.f32 %v323, %v324
        %326 = vadd.xlane.f32.xlu0 %v325
        %v327 = vpop.xlane.xlu0 %326
        %v328 = vsub.f32 %v260, %v327
        %s329 = smul.u32 %s22, 8
        %v330 = vlaneseq
        %v331 = vshrl.u32 %v330, 7
        %v332 = vstv %s329
        %v333 = vadd.s32 %v332, %v331
        %vm334 = vcmp.lt.s32.totalorder %v333, 12
        %v335 = vsel %vm334, %v328, 0.0
        %vm336 = vcmask 7168
        %v337 = vsel %vm336, %v335, 0.0
        %338 = vadd.xlane.f32.xlu0 %v337
        %v339 = vpop.xlane.xlu0 %338
        %v340 = vrot.slane %v339, 4
        %v341 = vadd.f32 %v339, %v340
        %v342 = vrot.slane %v341, 2
        %v343 = vadd.f32 %v341, %v342
        %v344 = vrot.slane %v343, 1
        %v345 = vadd.f32 %v343, %v344
        %s346 = vtos %v345
        %v347 = vstv %s346
        %348 = vst [vmem:[%s197] sm:$0xff] %v347
        %s349 = sand.u32 %s82, 1
        %s350 = scalar_lea.sflag [#allocation4], %s349
        %s351 = sand.u32 %s82, 1
        %s352 = smul.addr %s351, 8
        %s353 = scalar_lea.vmem [#allocation7], %s352
        // Predicated region
        $region37: #{tpu_custom_call.1} parent=27 // pred_check
          %p354 = pneg %p92
        $region38: #{tpu_custom_call.1} parent=27 // pred_check_branch
          %356 = sbr.rel (%p354) target = $region40
        $region39: #{tpu_custom_call.1} parent=27 // pred_region
          %s358 = ssub.s32 128, 128
          %359 = vsyncadd %s350, %s358
          %s360 = smul.addr %s22, 128
          %s361 = scalar_lea.hbm %s2, %s360
          %s363 = sshll.u32 %s353, 4
          %s364 = int_to_ptr.vmem [resolvable:$true] %s363
          %366 = dma.vmem_to_hbm [thread:$0]  %s364, 128, %s361, %s350
        $region40: #{tpu_custom_call.1} parent=27 // pred_fallthru
          _
      $region28: #{tpu_custom_call.1} parent=5 // pred_fallthru
        _
      %p367 = scmp.le.s32.totalorder 2, %s17
      // Predicated region
      $region41: #{tpu_custom_call.1} parent=5 // pred_check
        %p368 = pneg %p367
      $region42: #{tpu_custom_call.1} parent=5 // pred_check_branch
        %370 = sbr.rel (%p368) target = $region44
      $region43: #{tpu_custom_call.1} parent=5 // pred_region
        %s371 = ssub.s32 %s17, 2
        // Predicated region
        $region45: #{tpu_custom_call.1} parent=43 // pred_check
          %p372 = pneg %p98
        $region46: #{tpu_custom_call.1} parent=43 // pred_check_branch
          %374 = sbr.rel (%p372) target = $region48
        $region47: #{tpu_custom_call.1} parent=43 // pred_region
          %s375 = sand.u32 %s83, 1
          %s376 = scalar_lea.sflag [#allocation4], %s375
          %s377 = sand.u32 %s83, 1
          %s378 = smul.addr %s377, 8
          %s379 = scalar_lea.vmem [#allocation7], %s378
          %380 = dma.done %s376, 128
        $region48: #{tpu_custom_call.1} parent=43 // pred_fallthru
          _
      $region44: #{tpu_custom_call.1} parent=5 // pred_fallthru
        _
    $region6: #{tpu_custom_call.1} parent=1 // loop_footer
      %s21 = sadd.s32 1, %s17
    $region7: #{tpu_custom_call.1} parent=1 // loop_footer_branch
      %16 = sbr.rel target = $region3
    $region8: #{tpu_custom_call.1} parent=1 // loop_exit
      _
    %381 = vsyncpa [#allocation3], 1
    %s382 = scalar_lea.sflag [#allocation3], 1
    %383 = vsyncpa %s382, 1
    %384 = vsyncpa [#allocation6], 1
    %s385 = scalar_lea.sflag [#allocation6], 1
    %386 = vsyncpa %s385, 1
    %387 = vsyncpa [#allocation4], 1
    %s388 = scalar_lea.sflag [#allocation4], 1
    %389 = vsyncpa %s388, 1

</llo_original>
